<compile_context>
chip_gen: v6e
topology: v6e:2x2x1
jax: 0.10.0
libtpu: 0.0.40
codegen_flags: <defaults>
</compile_context>

<pallas_src>
import math

import jax
import jax.numpy as jnp
from jax.experimental import pallas as pl
from jax.experimental.pallas import tpu as pltpu

STATE_DIM = 6
K_PAD = 16                                  # layer-1 K padded for a clean bf16 MXU pass
HIDDEN_DIM = 128
NUM_MODEL = 3
NUM_INTENSITY = 3
HEAD_OUT = NUM_MODEL + NUM_INTENSITY + 1 + 1 + 1 + 1   # = 10 real output columns
HEAD_PAD = 128                              # lane-padded head width (unmasked vst)
SLAB_ROWS = 2 * HIDDEN_DIM + K_PAD          # 272 rows: w2 | wh | w1 in one bf16 slab
LN_EPS = 1e-5
SUBLANE = 16                                # bf16 sublane packing alignment


def _round_up(n, m):
    return ((n + m - 1) // m) * m


def _layernorm(h, gamma, beta):
    mu = jnp.mean(h, axis=-1, keepdims=True)
    var = jnp.mean((h - mu) ** 2, axis=-1, keepdims=True)
    return (h - mu) * jax.lax.rsqrt(var + LN_EPS) * gamma + beta


def policy_kernel(x_ref, w_ref, vec_ref, out_ref):
    # Packed small-vector params: one f32 DMA, static sublane slices.
    vec = vec_ref[...]                       # (8, 128) f32
    b1, g1, be1 = vec[0:1, :], vec[1:2, :], vec[2:3, :]
    b2, g2, be2 = vec[3:4, :], vec[4:5, :], vec[5:6, :]
    bh = vec[6:7, :]
    sig_mask = vec[7:8, :]                   # 1.0 at cols 6,7,8, else 0.0

    # Resident bf16 weight slab (one DMA): rows [0,128)=w2, [128,256)=wh,
    # [256,272)=w1 (K zero-padded 6 -> 16).
    w2 = w_ref[0:HIDDEN_DIM, :]
    wh = w_ref[HIDDEN_DIM:2 * HIDDEN_DIM, :]
    w1 = w_ref[2 * HIDDEN_DIM:SLAB_ROWS, :]

    x = x_ref[...].astype(jnp.bfloat16)      # (TB, 16); cols 6..15 are zero

    # ---- layer 1: Linear(6->128) as a single thin bf16 MXU pass
    h = jnp.dot(x, w1, preferred_element_type=jnp.float32) + b1
    h = jnp.maximum(h, 0.0)                  # ReLU
    h = _layernorm(h, g1, be1)               # Dropout(0.1) = identity at inference

    # ---- layer 2: Linear(128->128), bf16 MXU operands, f32 accumulation
    h = jnp.dot(h.astype(jnp.bfloat16), w2, preferred_element_type=jnp.float32) + b2
    h = jnp.maximum(h, 0.0)
    h = _layernorm(h, g2, be2)

    # ---- fused heads, padded to 128 lanes (full MXU N pass, unmasked vst)
    out = jnp.dot(h.astype(jnp.bfloat16), wh, preferred_element_type=jnp.float32) + bh
    out = jnp.where(sig_mask > 0.5, jax.nn.sigmoid(out), out)
    # TODO(synk): if a bundle dump shows the XLU still binding, offload the two
    # LayerNorm row-sums to the MXU (matmul against a resident ones column).
    out_ref[...] = out.astype(out_ref.dtype)     # bf16 lane-dense write


def _choose_tiling(B, block_b):
    """Balanced batch tiles; >=2 grid steps when possible (v7x megacore)."""
    b_al = _round_up(max(B, 1), SUBLANE)
    n_tiles = max(1, -(-b_al // block_b))
    if b_al >= 2 * SUBLANE:
        n_tiles = max(n_tiles, 2)            # give both v7x TensorCores work
    tb = _round_up(-(-b_al // n_tiles), SUBLANE)
    b_pad = _round_up(b_al, tb)
    return tb, b_pad


def policy_forward(x, params, *, block_b=1024):
    B = x.shape[0]
    TB, B_pad = _choose_tiling(B, block_b)

    # Pad batch to the tile multiple and features 6 -> 16 (zeros) in one shot.
    x_pad = jnp.zeros((B_pad, K_PAD), jnp.float32).at[:B, :STATE_DIM].set(
        x.astype(jnp.float32))

    out = pl.pallas_call(
        policy_kernel,
        out_shape=jax.ShapeDtypeStruct((B_pad, HEAD_PAD), jnp.bfloat16),
        grid=(B_pad // TB,),
        in_specs=[
            pl.BlockSpec((TB, K_PAD), lambda i: (i, 0)),               # x tile
            pl.BlockSpec((SLAB_ROWS, HIDDEN_DIM), lambda i: (0, 0)),   # bf16 weight slab (resident)
            pl.BlockSpec((8, HIDDEN_DIM), lambda i: (0, 0)),           # packed f32 vectors (resident)
        ],
        out_specs=pl.BlockSpec((TB, HEAD_PAD), lambda i: (i, 0)),
        compiler_params=pltpu.CompilerParams(
            dimension_semantics=("parallel",)),      # batch axis split across TCs
    )(x_pad, params["w_slab"], params["vec"])

    action_logits = out[:B, :HEAD_OUT - 1].astype(jnp.float32)   # (B, 9)
    value = out[:B, HEAD_OUT - 1:HEAD_OUT].astype(jnp.float32)   # (B, 1)
    return action_logits, value


def _xavier_uniform(key, fan_in, fan_out):
    bound = math.sqrt(6.0 / (fan_in + fan_out))
    # stored as (in, out) so forward is x @ W
    return jax.random.uniform(key, (fan_in, fan_out), jnp.float32, -bound, bound)


def init_params(key):
    ks = jax.random.split(key, 8)
    w1 = _xavier_uniform(ks[0], STATE_DIM, HIDDEN_DIM)            # (6, 128)
    w2 = _xavier_uniform(ks[1], HIDDEN_DIM, HIDDEN_DIM)           # (128, 128)
    # per-head xavier init (matches the separate nn.Linear heads), then fuse
    head_dims = [NUM_MODEL, NUM_INTENSITY, 1, 1, 1, 1]
    heads = [_xavier_uniform(ks[2 + i], HIDDEN_DIM, d) for i, d in enumerate(head_dims)]
    wh = jnp.concatenate(heads, axis=1)                           # (128, 10)

    # One resident bf16 weight slab: [0,128)=w2, [128,256)=wh (lane-padded),
    # [256,272)=w1 (K-padded 6 -> 16).
    slab = jnp.zeros((SLAB_ROWS, HEAD_PAD), jnp.float32)
    slab = slab.at[0:HIDDEN_DIM, :].set(w2)
    slab = slab.at[HIDDEN_DIM:2 * HIDDEN_DIM, :HEAD_OUT].set(wh)
    slab = slab.at[2 * HIDDEN_DIM:2 * HIDDEN_DIM + STATE_DIM, :].set(w1)
    w_slab = slab.astype(jnp.bfloat16)

    # Packed (8, 128) f32 small-vector slab:
    #   row 0 b1, 1 g1, 2 be1, 3 b2, 4 g2, 5 be2, 6 bh (padded), 7 sigmoid mask
    vec = jnp.zeros((8, HIDDEN_DIM), jnp.float32)
    vec = vec.at[1, :].set(1.0)                                   # g1 = ones
    vec = vec.at[4, :].set(1.0)                                   # g2 = ones
    vec = vec.at[7, 6:9].set(1.0)                                 # sigmoid on cols 6-8
    # all biases (rows 0,2,3,5,6) stay zero (PyTorch: constant_(bias, 0))

    return {"w_slab": w_slab, "vec": vec}                         # (272,128) bf16, (8,128) f32


def reference_forward(x, p):
    # Pure-JAX f32 reference using the same (bf16-stored) weight values.
    slab = p["w_slab"].astype(jnp.float32)
    w2 = slab[0:HIDDEN_DIM, :]
    wh = slab[HIDDEN_DIM:2 * HIDDEN_DIM, :HEAD_OUT]
    w1 = slab[2 * HIDDEN_DIM:2 * HIDDEN_DIM + STATE_DIM, :]
    vec = p["vec"]
    b1, g1, be1 = vec[0], vec[1], vec[2]
    b2, g2, be2 = vec[3], vec[4], vec[5]
    bh = vec[6, :HEAD_OUT]

    def ln(h, g, b):
        mu = jnp.mean(h, -1, keepdims=True)
        var = jnp.mean((h - mu) ** 2, -1, keepdims=True)
        return (h - mu) / jnp.sqrt(var + LN_EPS) * g + b

    h = ln(jnp.maximum(x @ w1 + b1, 0.0), g1, be1)
    h = ln(jnp.maximum(h @ w2 + b2, 0.0), g2, be2)
    out = h @ wh + bh
    model_l = out[:, 0:3]
    inten_l = out[:, 3:6]
    conf = jax.nn.sigmoid(out[:, 6:7])
    cmsis = jax.nn.sigmoid(out[:, 7:8])
    temporal = jax.nn.sigmoid(out[:, 8:9])
    action = jnp.concatenate([model_l, inten_l, conf, cmsis, temporal], axis=-1)
    value = out[:, 9:10]
    return action, value


if __name__ == "__main__":
    key = jax.random.PRNGKey(0)
    k_param, k_x = jax.random.split(key)
    params = init_params(k_param)

    batch = 4
    # SystemState-like features: battery, complexity, accuracy, time, temp, mem
    x = jax.random.uniform(k_x, (batch, STATE_DIM), jnp.float32)

    action_logits, value = policy_forward(x, params)
    jax.block_until_ready((action_logits, value))

    ref_action, ref_value = reference_forward(x, params)
    assert action_logits.shape == (batch, 9)
    assert value.shape == (batch, 1)
    # Tolerances relaxed vs. pure f32: MXU operands and the output store are
    # bf16 (accumulation stays f32), per the perf review.
    assert jnp.allclose(action_logits, ref_action, atol=5e-2, rtol=5e-2)
    assert jnp.allclose(value, ref_value, atol=5e-2, rtol=5e-2)

    print("KERNEL_OK")
</pallas_src>

<mosaic_0001>
module attributes {stable_mosaic.version = 11 : i64} {
  func.func @policy_kernel(%arg0: i32, %arg1: memref<16x16xf32, #tpu.memory_space<vmem>>, %arg2: memref<272x128xbf16, #tpu.memory_space<vmem>>, %arg3: memref<8x128xf32, #tpu.memory_space<vmem>>, %arg4: memref<16x128xbf16, #tpu.memory_space<vmem>>) attributes {dimension_semantics = [#tpu.dimension_semantics<parallel>], iteration_bounds = array<i64: 1>, scalar_prefetch = 0 : i64, scratch_operands = 0 : i64, tpu.core_type = #tpu.core_type<tc>, window_params = [{transform_indices = @transform_0, window_bounds = array<i64: 16, 16>}, {pipeline_mode = #tpu.pipeline_mode<synchronous>, transform_indices = @transform_1, window_bounds = array<i64: 272, 128>}, {pipeline_mode = #tpu.pipeline_mode<synchronous>, transform_indices = @transform_2, window_bounds = array<i64: 8, 128>}, {transform_indices = @transform_3, window_bounds = array<i64: 16, 128>}]} {
    %c0 = arith.constant 0 : index
    %c0_0 = arith.constant 0 : index
    %0 = vector.load %arg3[%c0, %c0_0] : memref<8x128xf32, #tpu.memory_space<vmem>>, vector<8x128xf32>
    %1 = vector.extract_strided_slice %0 {offsets = [0, 0], sizes = [1, 128], strides = [1, 1]} : vector<8x128xf32> to vector<1x128xf32>
    %2 = vector.extract_strided_slice %0 {offsets = [1, 0], sizes = [1, 128], strides = [1, 1]} : vector<8x128xf32> to vector<1x128xf32>
    %3 = vector.extract_strided_slice %0 {offsets = [2, 0], sizes = [1, 128], strides = [1, 1]} : vector<8x128xf32> to vector<1x128xf32>
    %4 = vector.extract_strided_slice %0 {offsets = [3, 0], sizes = [1, 128], strides = [1, 1]} : vector<8x128xf32> to vector<1x128xf32>
    %5 = vector.extract_strided_slice %0 {offsets = [4, 0], sizes = [1, 128], strides = [1, 1]} : vector<8x128xf32> to vector<1x128xf32>
    %6 = vector.extract_strided_slice %0 {offsets = [5, 0], sizes = [1, 128], strides = [1, 1]} : vector<8x128xf32> to vector<1x128xf32>
    %7 = vector.extract_strided_slice %0 {offsets = [6, 0], sizes = [1, 128], strides = [1, 1]} : vector<8x128xf32> to vector<1x128xf32>
    %8 = vector.extract_strided_slice %0 {offsets = [7, 0], sizes = [1, 128], strides = [1, 1]} : vector<8x128xf32> to vector<1x128xf32>
    %c0_1 = arith.constant 0 : index
    %c0_2 = arith.constant 0 : index
    %9 = vector.load %arg2[%c0_1, %c0_2] : memref<272x128xbf16, #tpu.memory_space<vmem>>, vector<128x128xbf16>
    %c128 = arith.constant 128 : index
    %c0_3 = arith.constant 0 : index
    %10 = vector.load %arg2[%c128, %c0_3] : memref<272x128xbf16, #tpu.memory_space<vmem>>, vector<128x128xbf16>
    %c256 = arith.constant 256 : index
    %c0_4 = arith.constant 0 : index
    %11 = vector.load %arg2[%c256, %c0_4] : memref<272x128xbf16, #tpu.memory_space<vmem>>, vector<16x128xbf16>
    %c0_5 = arith.constant 0 : index
    %c0_6 = arith.constant 0 : index
    %12 = vector.load %arg1[%c0_5, %c0_6] : memref<16x16xf32, #tpu.memory_space<vmem>>, vector<16x16xf32>
    %13 = arith.truncf %12 : vector<16x16xf32> to vector<16x16xbf16>
    %cst = arith.constant dense<0.000000e+00> : vector<16x128xf32>
    %14 = tpu.matmul %13, %11, %cst {dimension_numbers = #tpu.dot_dimension_numbers<[1], [0], [0], [1], [0, 0, 1, 1], [], []>} : vector<16x16xbf16>, vector<16x128xbf16>, vector<16x128xf32> -> vector<16x128xf32>
    %15 = vector.broadcast %1 : vector<1x128xf32> to vector<16x128xf32>
    %16 = arith.addf %14, %15 : vector<16x128xf32>
    %cst_7 = arith.constant 0.000000e+00 : f32
    %17 = vector.broadcast %cst_7 : f32 to vector<16x128xf32>
    %18 = arith.maximumf %16, %17 : vector<16x128xf32>
    %cst_8 = arith.constant dense<0.000000e+00> : vector<16xf32>
    %19 = vector.multi_reduction <add>, %18, %cst_8 [1] : vector<16x128xf32> to vector<16xf32>
    %20 = vector.shape_cast %19 : vector<16xf32> to vector<16x1xf32>
    %cst_9 = arith.constant 1.280000e+02 : f32
    %21 = vector.broadcast %cst_9 : f32 to vector<16x1xf32>
    %22 = arith.divf %20, %21 : vector<16x1xf32>
    %23 = vector.broadcast %22 : vector<16x1xf32> to vector<16x128xf32>
    %24 = arith.subf %18, %23 : vector<16x128xf32>
    %25 = arith.mulf %24, %24 : vector<16x128xf32>
    %cst_10 = arith.constant dense<0.000000e+00> : vector<16xf32>
    %26 = vector.multi_reduction <add>, %25, %cst_10 [1] : vector<16x128xf32> to vector<16xf32>
    %27 = vector.shape_cast %26 : vector<16xf32> to vector<16x1xf32>
    %cst_11 = arith.constant 1.280000e+02 : f32
    %28 = vector.broadcast %cst_11 : f32 to vector<16x1xf32>
    %29 = arith.divf %27, %28 : vector<16x1xf32>
    %30 = vector.broadcast %22 : vector<16x1xf32> to vector<16x128xf32>
    %31 = arith.subf %18, %30 : vector<16x128xf32>
    %cst_12 = arith.constant 9.99999974E-6 : f32
    %32 = vector.broadcast %cst_12 : f32 to vector<16x1xf32>
    %33 = arith.addf %29, %32 : vector<16x1xf32>
    %34 = math.rsqrt %33 : vector<16x1xf32>
    %35 = vector.broadcast %34 : vector<16x1xf32> to vector<16x128xf32>
    %36 = arith.mulf %31, %35 : vector<16x128xf32>
    %37 = vector.broadcast %2 : vector<1x128xf32> to vector<16x128xf32>
    %38 = arith.mulf %36, %37 : vector<16x128xf32>
    %39 = vector.broadcast %3 : vector<1x128xf32> to vector<16x128xf32>
    %40 = arith.addf %38, %39 : vector<16x128xf32>
    %41 = arith.truncf %40 : vector<16x128xf32> to vector<16x128xbf16>
    %cst_13 = arith.constant dense<0.000000e+00> : vector<16x128xf32>
    %42 = tpu.matmul %41, %9, %cst_13 {dimension_numbers = #tpu.dot_dimension_numbers<[1], [0], [0], [1], [0, 0, 1, 1], [], []>} : vector<16x128xbf16>, vector<128x128xbf16>, vector<16x128xf32> -> vector<16x128xf32>
    %43 = vector.broadcast %4 : vector<1x128xf32> to vector<16x128xf32>
    %44 = arith.addf %42, %43 : vector<16x128xf32>
    %cst_14 = arith.constant 0.000000e+00 : f32
    %45 = vector.broadcast %cst_14 : f32 to vector<16x128xf32>
    %46 = arith.maximumf %44, %45 : vector<16x128xf32>
    %cst_15 = arith.constant dense<0.000000e+00> : vector<16xf32>
    %47 = vector.multi_reduction <add>, %46, %cst_15 [1] : vector<16x128xf32> to vector<16xf32>
    %48 = vector.shape_cast %47 : vector<16xf32> to vector<16x1xf32>
    %cst_16 = arith.constant 1.280000e+02 : f32
    %49 = vector.broadcast %cst_16 : f32 to vector<16x1xf32>
    %50 = arith.divf %48, %49 : vector<16x1xf32>
    %51 = vector.broadcast %50 : vector<16x1xf32> to vector<16x128xf32>
    %52 = arith.subf %46, %51 : vector<16x128xf32>
    %53 = arith.mulf %52, %52 : vector<16x128xf32>
    %cst_17 = arith.constant dense<0.000000e+00> : vector<16xf32>
    %54 = vector.multi_reduction <add>, %53, %cst_17 [1] : vector<16x128xf32> to vector<16xf32>
    %55 = vector.shape_cast %54 : vector<16xf32> to vector<16x1xf32>
    %cst_18 = arith.constant 1.280000e+02 : f32
    %56 = vector.broadcast %cst_18 : f32 to vector<16x1xf32>
    %57 = arith.divf %55, %56 : vector<16x1xf32>
    %58 = vector.broadcast %50 : vector<16x1xf32> to vector<16x128xf32>
    %59 = arith.subf %46, %58 : vector<16x128xf32>
    %cst_19 = arith.constant 9.99999974E-6 : f32
    %60 = vector.broadcast %cst_19 : f32 to vector<16x1xf32>
    %61 = arith.addf %57, %60 : vector<16x1xf32>
    %62 = math.rsqrt %61 : vector<16x1xf32>
    %63 = vector.broadcast %62 : vector<16x1xf32> to vector<16x128xf32>
    %64 = arith.mulf %59, %63 : vector<16x128xf32>
    %65 = vector.broadcast %5 : vector<1x128xf32> to vector<16x128xf32>
    %66 = arith.mulf %64, %65 : vector<16x128xf32>
    %67 = vector.broadcast %6 : vector<1x128xf32> to vector<16x128xf32>
    %68 = arith.addf %66, %67 : vector<16x128xf32>
    %69 = arith.truncf %68 : vector<16x128xf32> to vector<16x128xbf16>
    %cst_20 = arith.constant dense<0.000000e+00> : vector<16x128xf32>
    %70 = tpu.matmul %69, %10, %cst_20 {dimension_numbers = #tpu.dot_dimension_numbers<[1], [0], [0], [1], [0, 0, 1, 1], [], []>} : vector<16x128xbf16>, vector<128x128xbf16>, vector<16x128xf32> -> vector<16x128xf32>
    %71 = vector.broadcast %7 : vector<1x128xf32> to vector<16x128xf32>
    %72 = arith.addf %70, %71 : vector<16x128xf32>
    %cst_21 = arith.constant 5.000000e-01 : f32
    %73 = vector.broadcast %cst_21 : f32 to vector<1x128xf32>
    %74 = arith.cmpf ogt, %8, %73 : vector<1x128xf32>
    %75 = arith.negf %72 : vector<16x128xf32>
    %76 = math.exp %75 : vector<16x128xf32>
    %cst_22 = arith.constant 1.000000e+00 : f32
    %77 = vector.broadcast %cst_22 : f32 to vector<16x128xf32>
    %78 = arith.addf %77, %76 : vector<16x128xf32>
    %79 = arith.divf %77, %78 : vector<16x128xf32>
    %80 = vector.shape_cast %74 : vector<1x128xi1> to vector<1x128xi1>
    %81 = vector.broadcast %80 : vector<1x128xi1> to vector<16x128xi1>
    %82 = arith.select %81, %79, %72 : vector<16x128xi1>, vector<16x128xf32>
    %83 = arith.truncf %82 : vector<16x128xf32> to vector<16x128xbf16>
    %c0_23 = arith.constant 0 : index
    %c0_24 = arith.constant 0 : index
    %84 = vector.load %arg4[%c0_23, %c0_24] : memref<16x128xbf16, #tpu.memory_space<vmem>>, vector<16x128xbf16>
    tpu.vector_store %arg4[%c0_23, %c0_24], %83 {strides = array<i32>} : memref<16x128xbf16, #tpu.memory_space<vmem>>, vector<16x128xbf16>,
    return
  }
  func.func @transform_0(%arg0: i32) -> (i32, i32) {
    %c0_i32 = arith.constant 0 : i32
    %c0_i32_0 = arith.constant 0 : i32
    return %arg0, %c0_i32 : i32, i32
  }
  func.func @transform_1(%arg0: i32) -> (i32, i32) {
    %c0_i32 = arith.constant 0 : i32
    %c0_i32_0 = arith.constant 0 : i32
    %c0_i32_1 = arith.constant 0 : i32
    return %c0_i32, %c0_i32_0 : i32, i32
  }
  func.func @transform_2(%arg0: i32) -> (i32, i32) {
    %c0_i32 = arith.constant 0 : i32
    %c0_i32_0 = arith.constant 0 : i32
    %c0_i32_1 = arith.constant 0 : i32
    return %c0_i32, %c0_i32_0 : i32, i32
  }
  func.func @transform_3(%arg0: i32) -> (i32, i32) {
    %c0_i32 = arith.constant 0 : i32
    %c0_i32_0 = arith.constant 0 : i32
    return %arg0, %c0_i32 : i32, i32
  }
}

</mosaic_0001>

<llo_original>
// kernel: tpu_custom_call.1
$region0: #{tpu_custom_call.1}
  #allocation0 [shape = 'u32[]', space=smem, size = 0x4, offset = 0x4, fixed_abs, tag = 'smem constant byte address 0x4 - core index']
  #allocation1 [shape = 'u32[144,128]{1,0:T(1,128)}', space=vmem, size = 0x12000, scoped, tag = 'internal scratch']
  %s0 = inlined_call_operand.hbm [shape: f32[16,16], index: 0, kind: input, shape index: {}]
  %s1 = inlined_call_operand.hbm [shape: bf16[272,128], index: 1, kind: input, shape index: {}]
  %s2 = inlined_call_operand.hbm [shape: f32[8,128], index: 2, kind: input, shape index: {}]
  %s3 = inlined_call_operand.hbm [shape: bf16[16,128], index: 3, kind: output, shape index: {}]
  %s4 = sld [smem:[#allocation0]]
  $region34: #{tpu_custom_call.1} parent=0
    _
  %s6 = ssub.s32 1, %s4
  %s7 = scalar_select 0, %s6, %s4
  $region1: #{tpu_custom_call.1} parent=0
    #allocation2 [shape = 'u8[8192]{0}', space=vmem, size = 0x2000, scoped, tag = 'input window, operand 0, single buffered']
    #allocation3 [shape = 's32[1]{0}', space=sflag, size = 0x4, scoped, tag = 'scoped memory for tpu_custom_call.1']
    #allocation4 [shape = 's32[1]{0}', space=sflag, size = 0x4, scoped, tag = 'scoped memory for tpu_custom_call.1']
    #allocation5 [shape = 'u8[69632]{0}', space=vmem, size = 0x11000, scoped, tag = 'input window, operand 1, single buffered']
    #allocation6 [shape = 's32[1]{0}', space=sflag, size = 0x4, scoped, tag = 'scoped memory for tpu_custom_call.1']
    #allocation7 [shape = 'u8[4096]{0}', space=vmem, size = 0x1000, scoped, tag = 'input window, operand 2, single buffered']
    #allocation8 [shape = 'u8[4096]{0}', space=vmem, size = 0x1000, scoped, tag = 'output window, operand 0, single buffered']
    %8 = vsyncpa [#allocation3], 0
    %9 = vsyncpa [#allocation6], 0
    %10 = vsyncpa [#allocation4], 0
    // Predicated region
    $region2: #{tpu_custom_call.1} parent=1 // pred_check
      _
    $region3: #{tpu_custom_call.1} parent=1 // pred_check_branch
      %12 = sbr.rel (0) target = $region5
    $region4: #{tpu_custom_call.1} parent=1 // pred_region
      %s14 = ssub.s32 256, 256
      %15 = vsyncadd [#allocation3], %s14
      %s16 = sshll.u32 [#allocation2], 4
      %s17 = int_to_ptr.vmem [resolvable:$true] %s16
      %22 = dma.hbm_to_vmem [thread:$0]  %s0, 256, %s17, [#allocation3], 128, 128, 8
    $region5: #{tpu_custom_call.1} parent=1 // pred_fallthru
      _
    // Predicated region
    $region6: #{tpu_custom_call.1} parent=1 // pred_check
      _
    $region7: #{tpu_custom_call.1} parent=1 // pred_check_branch
      %24 = sbr.rel (0) target = $region9
    $region8: #{tpu_custom_call.1} parent=1 // pred_region
      %s26 = ssub.s32 2176, 2176
      %27 = vsyncadd [#allocation6], %s26
      %s28 = sshll.u32 [#allocation5], 4
      %s29 = int_to_ptr.vmem [resolvable:$true] %s28
      %34 = dma.hbm_to_vmem [thread:$0]  %s1, 2176, %s29, [#allocation6], 64, 64, 4
    $region9: #{tpu_custom_call.1} parent=1 // pred_fallthru
      _
    // Predicated region
    $region10: #{tpu_custom_call.1} parent=1 // pred_check
      _
    $region11: #{tpu_custom_call.1} parent=1 // pred_check_branch
      %36 = sbr.rel (0) target = $region13
    $region12: #{tpu_custom_call.1} parent=1 // pred_region
      %s38 = ssub.s32 128, 128
      %39 = vsyncadd [#allocation6], %s38
      %s41 = sshll.u32 [#allocation7], 4
      %s42 = int_to_ptr.vmem [resolvable:$true] %s41
      %44 = dma.hbm_to_vmem [thread:$0]  %s2, 128, %s42, [#allocation6]
    $region13: #{tpu_custom_call.1} parent=1 // pred_fallthru
      _
    // Predicated region
    $region14: #{tpu_custom_call.1} parent=1 // pred_check
      _
    $region15: #{tpu_custom_call.1} parent=1 // pred_check_branch
      %46 = sbr.rel (0) target = $region17
    $region16: #{tpu_custom_call.1} parent=1 // pred_region
      %47 = dma.done [#allocation3], 256
    $region17: #{tpu_custom_call.1} parent=1 // pred_fallthru
      _
    // Predicated region
    $region18: #{tpu_custom_call.1} parent=1 // pred_check
      _
    $region19: #{tpu_custom_call.1} parent=1 // pred_check_branch
      %49 = sbr.rel (0) target = $region21
    $region20: #{tpu_custom_call.1} parent=1 // pred_region
      %50 = dma.done [#allocation6], 2176
    $region21: #{tpu_custom_call.1} parent=1 // pred_fallthru
      _
    // Predicated region
    $region22: #{tpu_custom_call.1} parent=1 // pred_check
      _
    $region23: #{tpu_custom_call.1} parent=1 // pred_check_branch
      %52 = sbr.rel (0) target = $region25
    $region24: #{tpu_custom_call.1} parent=1 // pred_region
      %53 = dma.done [#allocation6], 128
    $region25: #{tpu_custom_call.1} parent=1 // pred_fallthru
      _
    %v55 = vld [vmem:[#allocation7] sm:$0xff]
    %v56 = vld [vmem:[#allocation5] sm:$0xf]
    %v57 = vld [vmem:[#allocation5 + $0x4] sm:$0xf]
    %v58 = vld [vmem:[#allocation5 + $0x8] sm:$0xf]
    %v59 = vld [vmem:[#allocation5 + $0xc] sm:$0xf]
    %v60 = vld [vmem:[#allocation5 + $0x10] sm:$0xf]
    %v61 = vld [vmem:[#allocation5 + $0x14] sm:$0xf]
    %v62 = vld [vmem:[#allocation5 + $0x18] sm:$0xf]
    %v63 = vld [vmem:[#allocation5 + $0x1c] sm:$0xf]
    %v64 = vld [vmem:[#allocation5 + $0x20] sm:$0xf]
    %v65 = vld [vmem:[#allocation5 + $0x24] sm:$0xf]
    %v66 = vld [vmem:[#allocation5 + $0x28] sm:$0xf]
    %v67 = vld [vmem:[#allocation5 + $0x2c] sm:$0xf]
    %v68 = vld [vmem:[#allocation5 + $0x30] sm:$0xf]
    %v69 = vld [vmem:[#allocation5 + $0x34] sm:$0xf]
    %v70 = vld [vmem:[#allocation5 + $0x38] sm:$0xf]
    %v71 = vld [vmem:[#allocation5 + $0x3c] sm:$0xf]
    %v72 = vld [vmem:[#allocation5 + $0x40] sm:$0xf]
    %v73 = vld [vmem:[#allocation5 + $0x44] sm:$0xf]
    %v74 = vld [vmem:[#allocation5 + $0x48] sm:$0xf]
    %v75 = vld [vmem:[#allocation5 + $0x4c] sm:$0xf]
    %v76 = vld [vmem:[#allocation5 + $0x50] sm:$0xf]
    %v77 = vld [vmem:[#allocation5 + $0x54] sm:$0xf]
    %v78 = vld [vmem:[#allocation5 + $0x58] sm:$0xf]
    %v79 = vld [vmem:[#allocation5 + $0x5c] sm:$0xf]
    %v80 = vld [vmem:[#allocation5 + $0x60] sm:$0xf]
    %v81 = vld [vmem:[#allocation5 + $0x64] sm:$0xf]
    %v82 = vld [vmem:[#allocation5 + $0x68] sm:$0xf]
    %v83 = vld [vmem:[#allocation5 + $0x6c] sm:$0xf]
    %v84 = vld [vmem:[#allocation5 + $0x70] sm:$0xf]
    %v85 = vld [vmem:[#allocation5 + $0x74] sm:$0xf]
    %v86 = vld [vmem:[#allocation5 + $0x78] sm:$0xf]
    %v87 = vld [vmem:[#allocation5 + $0x7c] sm:$0xf]
    %v88 = vld [vmem:[#allocation5 + $0x80] sm:$0xf]
    %v89 = vld [vmem:[#allocation5 + $0x84] sm:$0xf]
    %v90 = vld [vmem:[#allocation2] sm:$0xff]
    %v91 = vld [vmem:[#allocation2 + $0x8] sm:$0xff]
    %v92 = vpack.c.bf16 %v91, %v90
    %v93 = vlaneseq
    %v94 = vshrl.u32 %v93, 7
    %v95 = vsub.s32 0, %v94
    %v96 = vrot.slane %v55, %v95
    %v99 = vunpack.c.l.b16 %v88
    %v100 = vunpack.c.l.b16 %v89
    %v101 = vpack.c.b16 %v100, %v99
    %vm103 = vcmask 130048
    %v105 = vsel %vm103, %v92, 0
    %107 = vmatprep.subr.bf16.mxu0 0
    %108 = vmatpush1.bf16.msra.mxu0 0
    %109 = vmatprep.subr.bf16.mxu0 0
    %110 = vmatpush1.bf16.msra.mxu0 0
    %111 = vmatprep.subr.bf16.mxu0 0
    %112 = vmatpush1.bf16.msra.mxu0 0
    %113 = vmatprep.subr.bf16.mxu0 0
    %114 = vmatpush1.bf16.msra.mxu0 0
    %115 = vmatprep.subr.bf16.mxu0 0
    %116 = vmatpush1.bf16.msra.mxu0 0
    %117 = vmatprep.subr.bf16.mxu0 0
    %118 = vmatpush1.bf16.msra.mxu0 0
    %119 = vmatprep.subr.bf16.mxu0 0
    %120 = vmatpush1.bf16.msra.mxu0 0
    %121 = vmatprep.subr.bf16.mxu0 0
    %122 = vmatpush1.bf16.msra.mxu0 %v101
    %123 = vmatprep.subr.bf16.mxu0 0
    %124 = vmatpush2.bf16.msra.mxu0 0
    %125 = vmatprep.subr.bf16.mxu0 0
    %126 = vmatpush2.bf16.msra.mxu0 0
    %127 = vmatprep.subr.bf16.mxu0 0
    %128 = vmatpush2.bf16.msra.mxu0 0
    %129 = vmatprep.subr.bf16.mxu0 0
    %130 = vmatpush2.bf16.msra.mxu0 0
    %131 = vmatprep.subr.bf16.mxu0 0
    %132 = vmatpush2.bf16.msra.mxu0 0
    %133 = vmatprep.subr.bf16.mxu0 0
    %134 = vmatpush2.bf16.msra.mxu0 0
    %135 = vmatprep.subr.bf16.mxu0 0
    %136 = vmatpush2.bf16.msra.mxu0 0
    %137 = vmatprep.subr.bf16.mxu0 0
    %138 = vmatpush2.bf16.msra.mxu0 0
    %139 = vmatprep.mubr.bf16.mxu0 0
    %140 = vmatmul.mubr.bf16.gmra.mxu0 %v105
    %v141 = vpop.f32.mrf.mxu0
    %v142 = vadd.f32 %v96, %v141
    %v143 = vpop.f32.mrf.mxu0
    %v144 = vpop.f32.mrf.mxu0
    %v145 = vadd.f32 %v96, %v144
    %v146 = vpop.f32.mrf.mxu0
    %147 = vdwg.mxu0
    %v148 = vmax.f32 %v142, 0.0
    %v149 = vmax.f32 %v145, 0.0
    %150 = vadd.xlane.f32.xlu0 %v148
    %v151 = vpop.xlane.xlu0 %150
    %152 = vadd.xlane.f32.xlu0 %v149
    %v153 = vpop.xlane.xlu0 %152
    %v154 = vrcp.pop 128.0
    %v155 = vmul.f32 %v151, %v154
    %v156 = vmul.f32 %v153, %v154
    %v157 = vsub.f32 %v148, %v155
    %v158 = vsub.f32 %v149, %v156
    %v159 = vmul.f32 %v157, %v157
    %v160 = vmul.f32 %v158, %v158
    %161 = vadd.xlane.f32.xlu0 %v159
    %v162 = vpop.xlane.xlu0 %161
    %163 = vadd.xlane.f32.xlu0 %v160
    %v164 = vpop.xlane.xlu0 %163
    %v165 = vmul.f32 %v162, %v154
    %v166 = vmul.f32 %v164, %v154
    %v167 = vadd.f32 %v165, 1e-05
    %v168 = vadd.f32 %v166, 1e-05
    %v169 = vrsqrt.pop %v167
    %v170 = vrsqrt.pop %v168
    %v171 = vmul.f32 %v157, %v169
    %v172 = vmul.f32 %v158, %v170
    %v173 = vlaneseq
    %v174 = vshrl.u32 %v173, 7
    %v175 = vsub.s32 1, %v174
    %v176 = vrot.slane %v55, %v175
    %v177 = vmul.f32 %v171, %v176
    %v178 = vmul.f32 %v172, %v176
    %v179 = vlaneseq
    %v180 = vshrl.u32 %v179, 7
    %v181 = vsub.s32 2, %v180
    %v182 = vrot.slane %v55, %v181
    %v183 = vadd.f32 %v177, %v182
    %v184 = vadd.f32 %v178, %v182
    %v185 = vpack.c.bf16 %v184, %v183
    %v186 = vlaneseq
    %v187 = vshrl.u32 %v186, 7
    %v188 = vsub.s32 3, %v187
    %v189 = vrot.slane %v55, %v188
    %v206 = vunpack.c.l.b16 %v56
    %v207 = vunpack.c.l.b16 %v57
    %v208 = vunpack.c.l.b16 %v58
    %v209 = vunpack.c.l.b16 %v59
    %v210 = vunpack.c.l.b16 %v60
    %v211 = vunpack.c.l.b16 %v61
    %v212 = vunpack.c.l.b16 %v62
    %v213 = vunpack.c.l.b16 %v63
    %v214 = vunpack.c.l.b16 %v64
    %v215 = vunpack.c.l.b16 %v65
    %v216 = vunpack.c.l.b16 %v66
    %v217 = vunpack.c.l.b16 %v67
    %v218 = vunpack.c.l.b16 %v68
    %v219 = vunpack.c.l.b16 %v69
    %v220 = vunpack.c.l.b16 %v70
    %v221 = vunpack.c.l.b16 %v71
    %v222 = vpack.c.b16 %v207, %v206
    %v223 = vpack.c.b16 %v209, %v208
    %v224 = vpack.c.b16 %v211, %v210
    %v225 = vpack.c.b16 %v213, %v212
    %v226 = vpack.c.b16 %v215, %v214
    %v227 = vpack.c.b16 %v217, %v216
    %v228 = vpack.c.b16 %v219, %v218
    %v229 = vpack.c.b16 %v221, %v220
    %238 = vmatprep.subr.bf16.mxu0 0
    %239 = vmatpush1.bf16.msra.mxu0 %v229
    %240 = vmatprep.subr.bf16.mxu0 0
    %241 = vmatpush1.bf16.msra.mxu0 %v228
    %242 = vmatprep.subr.bf16.mxu0 0
    %243 = vmatpush1.bf16.msra.mxu0 %v227
    %244 = vmatprep.subr.bf16.mxu0 0
    %245 = vmatpush1.bf16.msra.mxu0 %v226
    %246 = vmatprep.subr.bf16.mxu0 0
    %247 = vmatpush1.bf16.msra.mxu0 %v225
    %248 = vmatprep.subr.bf16.mxu0 0
    %249 = vmatpush1.bf16.msra.mxu0 %v224
    %250 = vmatprep.subr.bf16.mxu0 0
    %251 = vmatpush1.bf16.msra.mxu0 %v223
    %252 = vmatprep.subr.bf16.mxu0 0
    %253 = vmatpush1.bf16.msra.mxu0 %v222
    %254 = vmatprep.subr.bf16.mxu0 0
    %255 = vmatpush2.bf16.msra.mxu0 0
    %256 = vmatprep.subr.bf16.mxu0 0
    %257 = vmatpush2.bf16.msra.mxu0 0
    %258 = vmatprep.subr.bf16.mxu0 0
    %259 = vmatpush2.bf16.msra.mxu0 0
    %260 = vmatprep.subr.bf16.mxu0 0
    %261 = vmatpush2.bf16.msra.mxu0 0
    %262 = vmatprep.subr.bf16.mxu0 0
    %263 = vmatpush2.bf16.msra.mxu0 0
    %264 = vmatprep.subr.bf16.mxu0 0
    %265 = vmatpush2.bf16.msra.mxu0 0
    %266 = vmatprep.subr.bf16.mxu0 0
    %267 = vmatpush2.bf16.msra.mxu0 0
    %268 = vmatprep.subr.bf16.mxu0 0
    %269 = vmatpush2.bf16.msra.mxu0 0
    %270 = vmatprep.mubr.bf16.mxu0 0
    %271 = vmatmul.mubr.bf16.gmra.mxu0 %v185
    %v272 = vpop.f32.mrf.mxu0
    %v273 = vadd.f32 %v189, %v272
    %v274 = vpop.f32.mrf.mxu0
    %v275 = vpop.f32.mrf.mxu0
    %v276 = vadd.f32 %v189, %v275
    %v277 = vpop.f32.mrf.mxu0
    %278 = vdwg.mxu0
    %v279 = vmax.f32 %v273, 0.0
    %v280 = vmax.f32 %v276, 0.0
    %281 = vadd.xlane.f32.xlu0 %v279
    %v282 = vpop.xlane.xlu0 %281
    %283 = vadd.xlane.f32.xlu0 %v280
    %v284 = vpop.xlane.xlu0 %283
    %v285 = vmul.f32 %v282, %v154
    %v286 = vmul.f32 %v284, %v154
    %v287 = vsub.f32 %v279, %v285
    %v288 = vsub.f32 %v280, %v286
    %v289 = vmul.f32 %v287, %v287
    %v290 = vmul.f32 %v288, %v288
    %291 = vadd.xlane.f32.xlu0 %v289
    %v292 = vpop.xlane.xlu0 %291
    %293 = vadd.xlane.f32.xlu0 %v290
    %v294 = vpop.xlane.xlu0 %293
    %v295 = vmul.f32 %v292, %v154
    %v296 = vmul.f32 %v294, %v154
    %v297 = vadd.f32 %v295, 1e-05
    %v298 = vadd.f32 %v296, 1e-05
    %v299 = vrsqrt.pop %v297
    %v300 = vrsqrt.pop %v298
    %v301 = vmul.f32 %v287, %v299
    %v302 = vmul.f32 %v288, %v300
    %v303 = vlaneseq
    %v304 = vshrl.u32 %v303, 7
    %v305 = vsub.s32 4, %v304
    %v306 = vrot.slane %v55, %v305
    %v307 = vmul.f32 %v301, %v306
    %v308 = vmul.f32 %v302, %v306
    %v309 = vlaneseq
    %v310 = vshrl.u32 %v309, 7
    %v311 = vsub.s32 5, %v310
    %v312 = vrot.slane %v55, %v311
    %v313 = vadd.f32 %v307, %v312
    %v314 = vadd.f32 %v308, %v312
    %v315 = vpack.c.bf16 %v314, %v313
    %v316 = vlaneseq
    %v317 = vshrl.u32 %v316, 7
    %v318 = vsub.s32 6, %v317
    %v319 = vrot.slane %v55, %v318
    %v336 = vunpack.c.l.b16 %v72
    %v337 = vunpack.c.l.b16 %v73
    %v338 = vunpack.c.l.b16 %v74
    %v339 = vunpack.c.l.b16 %v75
    %v340 = vunpack.c.l.b16 %v76
    %v341 = vunpack.c.l.b16 %v77
    %v342 = vunpack.c.l.b16 %v78
    %v343 = vunpack.c.l.b16 %v79
    %v344 = vunpack.c.l.b16 %v80
    %v345 = vunpack.c.l.b16 %v81
    %v346 = vunpack.c.l.b16 %v82
    %v347 = vunpack.c.l.b16 %v83
    %v348 = vunpack.c.l.b16 %v84
    %v349 = vunpack.c.l.b16 %v85
    %v350 = vunpack.c.l.b16 %v86
    %v351 = vunpack.c.l.b16 %v87
    %v352 = vpack.c.b16 %v337, %v336
    %v353 = vpack.c.b16 %v339, %v338
    %v354 = vpack.c.b16 %v341, %v340
    %v355 = vpack.c.b16 %v343, %v342
    %v356 = vpack.c.b16 %v345, %v344
    %v357 = vpack.c.b16 %v347, %v346
    %v358 = vpack.c.b16 %v349, %v348
    %v359 = vpack.c.b16 %v351, %v350
    %368 = vmatprep.subr.bf16.mxu0 0
    %369 = vmatpush1.bf16.msra.mxu0 %v359
    %370 = vmatprep.subr.bf16.mxu0 0
    %371 = vmatpush1.bf16.msra.mxu0 %v358
    %372 = vmatprep.subr.bf16.mxu0 0
    %373 = vmatpush1.bf16.msra.mxu0 %v357
    %374 = vmatprep.subr.bf16.mxu0 0
    %375 = vmatpush1.bf16.msra.mxu0 %v356
    %376 = vmatprep.subr.bf16.mxu0 0
    %377 = vmatpush1.bf16.msra.mxu0 %v355
    %378 = vmatprep.subr.bf16.mxu0 0
    %379 = vmatpush1.bf16.msra.mxu0 %v354
    %380 = vmatprep.subr.bf16.mxu0 0
    %381 = vmatpush1.bf16.msra.mxu0 %v353
    %382 = vmatprep.subr.bf16.mxu0 0
    %383 = vmatpush1.bf16.msra.mxu0 %v352
    %384 = vmatprep.subr.bf16.mxu0 0
    %385 = vmatpush2.bf16.msra.mxu0 0
    %386 = vmatprep.subr.bf16.mxu0 0
    %387 = vmatpush2.bf16.msra.mxu0 0
    %388 = vmatprep.subr.bf16.mxu0 0
    %389 = vmatpush2.bf16.msra.mxu0 0
    %390 = vmatprep.subr.bf16.mxu0 0
    %391 = vmatpush2.bf16.msra.mxu0 0
    %392 = vmatprep.subr.bf16.mxu0 0
    %393 = vmatpush2.bf16.msra.mxu0 0
    %394 = vmatprep.subr.bf16.mxu0 0
    %395 = vmatpush2.bf16.msra.mxu0 0
    %396 = vmatprep.subr.bf16.mxu0 0
    %397 = vmatpush2.bf16.msra.mxu0 0
    %398 = vmatprep.subr.bf16.mxu0 0
    %399 = vmatpush2.bf16.msra.mxu0 0
    %400 = vmatprep.mubr.bf16.mxu0 0
    %401 = vmatmul.mubr.bf16.gmra.mxu0 %v315
    %v402 = vpop.f32.mrf.mxu0
    %v403 = vadd.f32 %v319, %v402
    %v404 = vpop.f32.mrf.mxu0
    %v405 = vpop.f32.mrf.mxu0
    %v406 = vadd.f32 %v319, %v405
    %v407 = vpop.f32.mrf.mxu0
    %408 = vdwg.mxu0
    %vm409 = vcmp.gt.f32.partialorder %v55, 0.5
    %v410 = vxor.u32 %v403, 2147483648
    %v411 = vxor.u32 %v406, 2147483648
    %v412 = vmul.f32 %v410, 1.442695
    %v413 = vpow.pop %v412
    %v414 = vmul.f32 %v411, 1.442695
    %v415 = vpow.pop %v414
    %v416 = vadd.f32 %v413, 1.0
    %v417 = vadd.f32 %v415, 1.0
    %v418 = vrcp.pop %v416
    %v419 = vmul.f32 1.0, %v418
    %v420 = vrcp.pop %v417
    %v421 = vmul.f32 1.0, %v420
    %v422 = vsel %vm409, 1, 0
    %v423 = vlaneseq
    %v424 = vshrl.u32 %v423, 7
    %v425 = vsub.s32 7, %v424
    %v426 = vrot.slane %v422, %v425
    %vm427 = vcmp.eq.s32.totalorder %v426, 1
    %v428 = vsel %vm427, %v419, %v403
    %v429 = vsel %vm427, %v421, %v406
    %v430 = vpack.c.bf16 %v429, %v428
    %v432 = vunpack.c.l.b16 %v430
    %v433 = vunpack.c.h.b16 %v430
    %v434 = vpack.c.b16 %v432, %v432
    %v435 = vpack.c.b16 %v433, %v433
    %438 = vst [vmem:[#allocation8] sm:$0xf] %v434
    %439 = vst [vmem:[#allocation8 + $0x4] sm:$0xf] %v435
    // Predicated region
    $region26: #{tpu_custom_call.1} parent=1 // pred_check
      _
    $region27: #{tpu_custom_call.1} parent=1 // pred_check_branch
      %441 = sbr.rel (0) target = $region29
    $region28: #{tpu_custom_call.1} parent=1 // pred_region
      %s443 = ssub.s32 128, 128
      %444 = vsyncadd [#allocation4], %s443
      %s445 = sshll.u32 [#allocation8], 4
      %s446 = int_to_ptr.vmem [resolvable:$true] %s445
      %451 = dma.vmem_to_hbm [thread:$0]  %s446, 128, %s3, [#allocation4], 64, 64, 4
    $region29: #{tpu_custom_call.1} parent=1 // pred_fallthru
      _
    // Predicated region
    $region30: #{tpu_custom_call.1} parent=1 // pred_check
      _
    $region31: #{tpu_custom_call.1} parent=1 // pred_check_branch
      %453 = sbr.rel (0) target = $region33
    $region32: #{tpu_custom_call.1} parent=1 // pred_region
      %454 = dma.done [#allocation4], 128
    $region33: #{tpu_custom_call.1} parent=1 // pred_fallthru
      _
    %455 = vsyncpa [#allocation3], 1
    %456 = vsyncpa [#allocation6], 1
    %457 = vsyncpa [#allocation4], 1

</llo_original>
